<compile_context>
chip_gen: v7x
topology: tpu7x:2x2x1
jax: 0.10.0
libtpu: 0.0.40
codegen_flags: <defaults>
</compile_context>

<pallas_src>
import functools

import jax
import jax.numpy as jnp
from jax.experimental import pallas as pl
from jax.experimental.pallas import tpu as pltpu


def _actor_kernel(x_ref, w1_ref, b1_ref, w2_ref, b2_ref, probs_ref, *, matmul_dtype):
    # Hidden layer: ReLU(x @ W1 + b1)   (MXU matmul + VPU elementwise).
    x = x_ref[...].astype(matmul_dtype)
    w1 = w1_ref[...].astype(matmul_dtype)
    h = jnp.dot(x, w1, preferred_element_type=jnp.float32)
    h = jnp.maximum(h + b1_ref[...], 0.0)          # (TB, H) + (1, H) broadcast

    # Output layer over the 128-lane padded action axis.
    # w2 pad columns are 0 and b2 pad lanes are -1e30, so padded-lane logits
    # are exactly -1e30 -> exp() == 0 in the softmax. No in-kernel mask needed.
    logits = jnp.dot(h.astype(matmul_dtype), w2_ref[...].astype(matmul_dtype),
                     preferred_element_type=jnp.float32)
    logits = logits + b2_ref[...]                  # (TB, A_pad) + (1, A_pad)

    # Numerically stable softmax over the action axis (all f32).
    m = jnp.max(logits, axis=1, keepdims=True)
    e = jnp.exp(logits - m)
    denom = jnp.sum(e, axis=1, keepdims=True)
    # EUP approximate reciprocal + one Newton step (full f32 accuracy, cheap).
    r = pl.reciprocal(denom, approx=True)
    r = r * (2.0 - denom * r)
    probs_ref[...] = (e * r).astype(probs_ref.dtype)


def _round_up(v, m):
    return ((v + m - 1) // m) * m


def init_actor_params(key, state_space, hidden_size, action_space):
    """Deterministic init mimicking nn.Linear's U(-1/sqrt(fan_in), 1/sqrt(fan_in))."""
    k1, k2, k3, k4 = jax.random.split(key, 4)
    lim1 = 1.0 / jnp.sqrt(jnp.float32(state_space))
    lim2 = 1.0 / jnp.sqrt(jnp.float32(hidden_size))
    w1 = jax.random.uniform(k1, (state_space, hidden_size), jnp.float32, -lim1, lim1)
    b1 = jax.random.uniform(k2, (1, hidden_size), jnp.float32, -lim1, lim1)
    w2 = jax.random.uniform(k3, (hidden_size, action_space), jnp.float32, -lim2, lim2)
    b2 = jax.random.uniform(k4, (1, action_space), jnp.float32, -lim2, lim2)
    return w1, b1, w2, b2


def prepare_actor_params(w1, b1, w2, b2):
    """One-time padding of the action axis to 128 lanes (lane-dense output).

    Done once (not per forward call): w2 pad columns are 0 and b2 pad lanes
    are -1e30, which folds the softmax pad-lane mask into the bias add.
    NOTE: -1e30 assumes f32 compute; recheck if compute dtype ever goes bf16.
    """
    _, action_space = w2.shape
    a_pad = max(128, _round_up(action_space, 128))
    w2_p = jnp.pad(w2, ((0, 0), (0, a_pad - action_space)))
    b2_p = jnp.pad(b2, ((0, 0), (0, a_pad - action_space)), constant_values=-1e30)
    return {"w1": w1, "b1": b1, "w2": w2_p, "b2": b2_p,
            "action_space": action_space}


def actor_forward(x, params, *, block_batch=1024, slice_output=True):
    """Returns action probabilities.

    slice_output=True  -> (batch, action_space), matching the PyTorch module.
    slice_output=False -> padded (b_pad, 128) probs (pad lanes are exactly 0),
                          avoiding an extra slice pass when the consumer
                          (e.g. categorical sampling) can use it directly.
    """
    w1, b1 = params["w1"], params["b1"]
    w2_p, b2_p = params["w2"], params["b2"]
    action_space = params["action_space"]

    batch, state_space = x.shape
    hidden = w1.shape[1]
    a_pad = w2_p.shape[1]

    # bf16 MXU inputs only once the contraction dims are large enough to matter
    # (f32 matmul ~3x bf16 passes on v6e/v7x); softmax math stays f32 always.
    matmul_dtype = jnp.bfloat16 if min(state_space, hidden) >= 128 else jnp.float32
    kernel = functools.partial(_actor_kernel, matmul_dtype=matmul_dtype)

    # Pad batch only to the f32 sublane multiple (8), and only if needed.
    b_pad = _round_up(batch, 8)
    x_p = x if b_pad == batch else jnp.pad(x, ((0, b_pad - batch), (0, 0)))

    if b_pad <= 256:
        # Single tile: no grid, no pipelining scaffolding — whole arrays in VMEM.
        # TODO(synk): for tiny RL-inference batches this is launch/DMA-latency
        # bound; the real win is fusing with the critic forward / sampling.
        probs_p = pl.pallas_call(
            kernel,
            out_shape=jax.ShapeDtypeStruct((b_pad, a_pad), jnp.float32),
        )(x_p, w1, b1, w2_p, b2_p)
    else:
        # Batch-tiled path: tile only the batch; weights are full-array blocks
        # (index_map -> (0, 0) every tile -> resident in VMEM, DMA'd once).
        # Cap the tile so the grid has >= 2 iterations: with "parallel"
        # semantics v7x's two TensorCores each take tiles (no-op on v5e/v6e).
        tb = min(block_batch, _round_up(pl.cdiv(b_pad, 2), 256))
        grid = pl.cdiv(b_pad, tb)       # tail block writes are masked by Pallas
        probs_p = pl.pallas_call(
            kernel,
            out_shape=jax.ShapeDtypeStruct((b_pad, a_pad), jnp.float32),
            grid_spec=pl.GridSpec(
                grid=(grid,),
                in_specs=[
                    pl.BlockSpec((tb, state_space), lambda i: (i, 0)),
                    pl.BlockSpec((state_space, hidden), lambda i: (0, 0)),
                    pl.BlockSpec((1, hidden), lambda i: (0, 0)),
                    pl.BlockSpec((hidden, a_pad), lambda i: (0, 0)),
                    pl.BlockSpec((1, a_pad), lambda i: (0, 0)),
                ],
                out_specs=pl.BlockSpec((tb, a_pad), lambda i: (i, 0)),
            ),
            compiler_params=pltpu.CompilerParams(
                dimension_semantics=("parallel",)),
        )(x_p, w1, b1, w2_p, b2_p)

    if slice_output:
        return probs_p[:batch, :action_space]
    return probs_p   # padded: rows >= batch are meaningless, lanes >= A are 0


if __name__ == "__main__":
    # Small shapes consistent with the module: a batch of flat state vectors.
    batch = 8
    state_space = 16
    hidden_size = 32
    action_space = 8

    key = jax.random.PRNGKey(0)
    kx, kp, kx2, kx3 = jax.random.split(key, 4)
    x = jax.random.normal(kx, (batch, state_space), jnp.float32)
    w1, b1, w2, b2 = init_actor_params(kp, state_space, hidden_size, action_space)
    params = prepare_actor_params(w1, b1, w2, b2)   # one-time padding (hoisted)

    def ref_probs(xi):
        h = jnp.maximum(xi @ w1 + b1, 0.0)
        return jax.nn.softmax(h @ w2 + b2, axis=1)

    # 1) Single-tile (grid-less) path.
    probs = jax.block_until_ready(actor_forward(x, params))
    assert probs.shape == (batch, action_space)
    assert jnp.allclose(probs, ref_probs(x), atol=1e-5, rtol=1e-5)
    assert jnp.allclose(jnp.sum(probs, axis=1), 1.0, atol=1e-5)

    # 2) Batch-tiled path: grid >= 2 "parallel" tiles (both v7x TCs used).
    big_batch = 512
    x_big = jax.random.normal(kx2, (big_batch, state_space), jnp.float32)
    probs_big = jax.block_until_ready(actor_forward(x_big, params))
    assert probs_big.shape == (big_batch, action_space)
    assert jnp.allclose(probs_big, ref_probs(x_big), atol=1e-5, rtol=1e-5)
    assert jnp.allclose(jnp.sum(probs_big, axis=1), 1.0, atol=1e-5)

    # 3) Non-multiple batch: cdiv grid + masked tail block (no 2x over-pad).
    odd_batch = 300
    x_odd = jax.random.normal(kx3, (odd_batch, state_space), jnp.float32)
    probs_odd = jax.block_until_ready(actor_forward(x_odd, params))
    assert probs_odd.shape == (odd_batch, action_space)
    assert jnp.allclose(probs_odd, ref_probs(x_odd), atol=1e-5, rtol=1e-5)

    # 4) Padded-output path (no slice pass): pad lanes are exactly 0.
    probs_pad = jax.block_until_ready(actor_forward(x, params, slice_output=False))
    assert probs_pad.shape[1] == 128
    assert jnp.allclose(probs_pad[:batch, :action_space], ref_probs(x),
                        atol=1e-5, rtol=1e-5)
    assert jnp.all(probs_pad[:batch, action_space:] == 0.0)

    # TODO(synk): Categorical(probs) (sampling / log_prob) is a distribution
    # wrapper, not a tensor op — consumed downstream from `probs` in plain JAX.
    print("KERNEL_OK")
</pallas_src>

<mosaic_0001>
module attributes {stable_mosaic.version = 11 : i64} {
  func.func @_actor_kernel(%arg0: memref<8x16xf32, #tpu.memory_space<vmem>>, %arg1: memref<16x32xf32, #tpu.memory_space<vmem>>, %arg2: memref<1x32xf32, #tpu.memory_space<vmem>>, %arg3: memref<32x128xf32, #tpu.memory_space<vmem>>, %arg4: memref<1x128xf32, #tpu.memory_space<vmem>>, %arg5: memref<8x128xf32, #tpu.memory_space<vmem>>) attributes {dimension_semantics = [], scalar_prefetch = 0 : i64, scratch_operands = 0 : i64, tpu.core_type = #tpu.core_type<tc>} {
    %c0 = arith.constant 0 : index
    %c0_0 = arith.constant 0 : index
    %0 = vector.load %arg0[%c0, %c0_0] : memref<8x16xf32, #tpu.memory_space<vmem>>, vector<8x16xf32>
    %c0_1 = arith.constant 0 : index
    %c0_2 = arith.constant 0 : index
    %1 = vector.load %arg1[%c0_1, %c0_2] : memref<16x32xf32, #tpu.memory_space<vmem>>, vector<16x32xf32>
    %cst = arith.constant dense<0.000000e+00> : vector<8x32xf32>
    %2 = tpu.matmul %0, %1, %cst {dimension_numbers = #tpu.dot_dimension_numbers<[1], [0], [0], [1], [0, 0, 1, 1], [], []>} : vector<8x16xf32>, vector<16x32xf32>, vector<8x32xf32> -> vector<8x32xf32>
    %c0_3 = arith.constant 0 : index
    %c0_4 = arith.constant 0 : index
    %3 = vector.load %arg2[%c0_3, %c0_4] : memref<1x32xf32, #tpu.memory_space<vmem>>, vector<1x32xf32>
    %4 = vector.broadcast %3 : vector<1x32xf32> to vector<8x32xf32>
    %5 = arith.addf %2, %4 : vector<8x32xf32>
    %cst_5 = arith.constant 0.000000e+00 : f32
    %6 = vector.broadcast %cst_5 : f32 to vector<8x32xf32>
    %7 = arith.maximumf %5, %6 : vector<8x32xf32>
    %c0_6 = arith.constant 0 : index
    %c0_7 = arith.constant 0 : index
    %8 = vector.load %arg3[%c0_6, %c0_7] : memref<32x128xf32, #tpu.memory_space<vmem>>, vector<32x128xf32>
    %cst_8 = arith.constant dense<0.000000e+00> : vector<8x128xf32>
    %9 = tpu.matmul %7, %8, %cst_8 {dimension_numbers = #tpu.dot_dimension_numbers<[1], [0], [0], [1], [0, 0, 1, 1], [], []>} : vector<8x32xf32>, vector<32x128xf32>, vector<8x128xf32> -> vector<8x128xf32>
    %c0_9 = arith.constant 0 : index
    %c0_10 = arith.constant 0 : index
    %10 = vector.load %arg4[%c0_9, %c0_10] : memref<1x128xf32, #tpu.memory_space<vmem>>, vector<1x128xf32>
    %11 = vector.broadcast %10 : vector<1x128xf32> to vector<8x128xf32>
    %12 = arith.addf %9, %11 : vector<8x128xf32>
    %cst_11 = arith.constant dense<0xFF800000> : vector<8xf32>
    %13 = vector.multi_reduction <maximumf>, %12, %cst_11 [1] : vector<8x128xf32> to vector<8xf32>
    %14 = vector.shape_cast %13 : vector<8xf32> to vector<8x1xf32>
    %15 = vector.broadcast %14 : vector<8x1xf32> to vector<8x128xf32>
    %16 = arith.subf %12, %15 : vector<8x128xf32>
    %17 = math.exp %16 : vector<8x128xf32>
    %cst_12 = arith.constant dense<0.000000e+00> : vector<8xf32>
    %18 = vector.multi_reduction <add>, %17, %cst_12 [1] : vector<8x128xf32> to vector<8xf32>
    %19 = vector.shape_cast %18 : vector<8xf32> to vector<8x1xf32>
    %20 = tpu.reciprocal %19 {approx = true} : vector<8x1xf32> -> vector<8x1xf32>
    %21 = arith.mulf %19, %20 : vector<8x1xf32>
    %cst_13 = arith.constant 2.000000e+00 : f32
    %22 = vector.broadcast %cst_13 : f32 to vector<8x1xf32>
    %23 = arith.subf %22, %21 : vector<8x1xf32>
    %24 = arith.mulf %20, %23 : vector<8x1xf32>
    %25 = vector.broadcast %24 : vector<8x1xf32> to vector<8x128xf32>
    %26 = arith.mulf %17, %25 : vector<8x128xf32>
    %c0_14 = arith.constant 0 : index
    %c0_15 = arith.constant 0 : index
    %27 = vector.load %arg5[%c0_14, %c0_15] : memref<8x128xf32, #tpu.memory_space<vmem>>, vector<8x128xf32>
    tpu.vector_store %arg5[%c0_14, %c0_15], %26 {strides = array<i32>} : memref<8x128xf32, #tpu.memory_space<vmem>>, vector<8x128xf32>,
    return
  }
}

</mosaic_0001>

<llo_original>
// kernel: tpu_custom_call.1
$region0: #{tpu_custom_call.1}
  #allocation0 [shape = 'u32[]', space=smem, size = 0x4, offset = 0x4, fixed_abs, tag = 'smem constant byte address 0x4 - core index']
  #allocation1 [shape = 'u32[144,128]{1,0:T(1,128)}', space=vmem, size = 0x12000, scoped, tag = 'internal scratch']
  %s0 = inlined_call_operand.hbm [shape: f32[8,16], index: 0, kind: input, shape index: {}]
  %s1 = inlined_call_operand.hbm [shape: f32[16,32], index: 1, kind: input, shape index: {}]
  %s2 = inlined_call_operand.vmem [shape: f32[1,32], index: 2, kind: input, shape index: {}]
  %s3 = inlined_call_operand.hbm [shape: f32[32,128], index: 3, kind: input, shape index: {}]
  %s4 = inlined_call_operand.vmem [shape: f32[1,128], index: 4, kind: input, shape index: {}]
  %s5 = inlined_call_operand.hbm [shape: f32[8,128], index: 5, kind: output, shape index: {}]
  %s6 = sld [smem:[#allocation0]]
  $region42: #{tpu_custom_call.1} parent=0
    _
  %s8 = ssub.s32 1, %s6
  %s9 = scalar_select 0, %s8, %s6
  $region1: #{tpu_custom_call.1} parent=0
    #allocation2 [shape = 'u8[4096]{0}', space=vmem, size = 0x1000, scoped, tag = 'input window, operand 0, single buffered']
    #allocation3 [shape = 's32[1]{0}', space=sflag, size = 0x4, scoped, tag = 'scoped memory for tpu_custom_call.1']
    #allocation4 [shape = 's32[1]{0}', space=sflag, size = 0x4, scoped, tag = 'scoped memory for tpu_custom_call.1']
    #allocation5 [shape = 'u8[8192]{0}', space=vmem, size = 0x2000, scoped, tag = 'input window, operand 1, single buffered']
    #allocation6 [shape = 's32[1]{0}', space=sflag, size = 0x4, scoped, tag = 'scoped memory for tpu_custom_call.1']
    #allocation7 [shape = 'u8[16384]{0}', space=vmem, size = 0x4000, scoped, tag = 'input window, operand 3, single buffered']
    #allocation8 [shape = 'u8[4096]{0}', space=vmem, size = 0x1000, scoped, tag = 'output window, operand 0, single buffered']
    %10 = vsyncpa [#allocation3], 0
    %11 = vsyncpa [#allocation6], 0
    %12 = vsyncpa [#allocation4], 0
    // Predicated region
    $region2: #{tpu_custom_call.1} parent=1 // pred_check
      _
    $region3: #{tpu_custom_call.1} parent=1 // pred_check_branch
      %14 = sbr.rel (0) target = $region5
    $region4: #{tpu_custom_call.1} parent=1 // pred_region
      %s16 = ssub.s32 128, 128
      %17 = vsyncadd [#allocation3], %s16
      %s19 = sshll.u32 [#allocation2], 4
      %s20 = int_to_ptr.vmem [resolvable:$true] %s19
      %22 = dma.hbm_to_vmem [thread:$0]  %s0, 128, %s20, [#allocation3]
    $region5: #{tpu_custom_call.1} parent=1 // pred_fallthru
      _
    // Predicated region
    $region6: #{tpu_custom_call.1} parent=1 // pred_check
      _
    $region7: #{tpu_custom_call.1} parent=1 // pred_check_branch
      %24 = sbr.rel (0) target = $region9
    $region8: #{tpu_custom_call.1} parent=1 // pred_region
      %s26 = ssub.s32 256, 256
      %27 = vsyncadd [#allocation6], %s26
      %s28 = sshll.u32 [#allocation5], 4
      %s29 = int_to_ptr.vmem [resolvable:$true] %s28
      %34 = dma.hbm_to_vmem [thread:$0]  %s1, 256, %s29, [#allocation6], 128, 128, 8
    $region9: #{tpu_custom_call.1} parent=1 // pred_fallthru
      _
    // Predicated region
    $region10: #{tpu_custom_call.1} parent=1 // pred_check
      _
    $region11: #{tpu_custom_call.1} parent=1 // pred_check_branch
      %36 = sbr.rel (0) target = $region13
    $region12: #{tpu_custom_call.1} parent=1 // pred_region
      _
    $region13: #{tpu_custom_call.1} parent=1 // pred_fallthru
      _
    // Predicated region
    $region14: #{tpu_custom_call.1} parent=1 // pred_check
      _
    $region15: #{tpu_custom_call.1} parent=1 // pred_check_branch
      %38 = sbr.rel (0) target = $region17
    $region16: #{tpu_custom_call.1} parent=1 // pred_region
      %s40 = ssub.s32 512, 512
      %41 = vsyncadd [#allocation6], %s40
      %s42 = sshll.u32 [#allocation7], 4
      %s43 = int_to_ptr.vmem [resolvable:$true] %s42
      %48 = dma.hbm_to_vmem [thread:$0]  %s3, 512, %s43, [#allocation6], 128, 128, 8
    $region17: #{tpu_custom_call.1} parent=1 // pred_fallthru
      _
    // Predicated region
    $region18: #{tpu_custom_call.1} parent=1 // pred_check
      _
    $region19: #{tpu_custom_call.1} parent=1 // pred_check_branch
      %50 = sbr.rel (0) target = $region21
    $region20: #{tpu_custom_call.1} parent=1 // pred_region
      _
    $region21: #{tpu_custom_call.1} parent=1 // pred_fallthru
      _
    // Predicated region
    $region22: #{tpu_custom_call.1} parent=1 // pred_check
      _
    $region23: #{tpu_custom_call.1} parent=1 // pred_check_branch
      %52 = sbr.rel (0) target = $region25
    $region24: #{tpu_custom_call.1} parent=1 // pred_region
      %53 = dma.done [#allocation3], 128
    $region25: #{tpu_custom_call.1} parent=1 // pred_fallthru
      _
    // Predicated region
    $region26: #{tpu_custom_call.1} parent=1 // pred_check
      _
    $region27: #{tpu_custom_call.1} parent=1 // pred_check_branch
      %55 = sbr.rel (0) target = $region29
    $region28: #{tpu_custom_call.1} parent=1 // pred_region
      %56 = dma.done [#allocation6], 256
    $region29: #{tpu_custom_call.1} parent=1 // pred_fallthru
      _
    // Predicated region
    $region30: #{tpu_custom_call.1} parent=1 // pred_check
      _
    $region31: #{tpu_custom_call.1} parent=1 // pred_check_branch
      %58 = sbr.rel (0) target = $region33
    $region32: #{tpu_custom_call.1} parent=1 // pred_region
      %59 = dma.done [#allocation6], 512
    $region33: #{tpu_custom_call.1} parent=1 // pred_fallthru
      _
    %v60 = vld [vmem:[#allocation2] sm:$0xff]
    %v61 = vld [vmem:[#allocation5] sm:$0xff]
    %v62 = vld [vmem:[#allocation5 + $0x8] sm:$0xff]
    %v63 = vld [vmem:[%s2] sm:$0x1]
    %v65 = vlaneseq
    %v66 = vshrl.u32 %v65, 7
    %v67 = vsub.s32 0, %v66
    %v68 = vrot.slane %v63, %v67
    %vm70 = vcmask 130048
    %v72 = vsel %vm70, %v60, 0
    %74 = vmatprep.subr.mxu0 0.0
    %75 = vmatpush1.msra.mxu0 %v61
    %76 = vmatprep.subr.mxu0 0.0
    %77 = vmatpush1.msra.mxu0 %v62
    %78 = vmatprep.subr.mxu0 0.0
    %79 = vmatpush1.msra.mxu0 0.0
    %80 = vmatprep.subr.mxu0 0.0
    %81 = vmatpush1.msra.mxu0 0.0
    %82 = vmatprep.subr.mxu0 0.0
    %83 = vmatpush1.msra.mxu0 0.0
    %84 = vmatprep.subr.mxu0 0.0
    %85 = vmatpush1.msra.mxu0 0.0
    %86 = vmatprep.subr.mxu0 0.0
    %87 = vmatpush1.msra.mxu0 0.0
    %88 = vmatprep.subr.mxu0 0.0
    %89 = vmatpush1.msra.mxu0 0.0
    %90 = vmatprep.subr.mxu0 0.0
    %91 = vmatpush1.msra.mxu0 0.0
    %92 = vmatprep.subr.mxu0 0.0
    %93 = vmatpush1.msra.mxu0 0.0
    %94 = vmatprep.subr.mxu0 0.0
    %95 = vmatpush1.msra.mxu0 0.0
    %96 = vmatprep.subr.mxu0 0.0
    %97 = vmatpush1.msra.mxu0 0.0
    %98 = vmatprep.subr.mxu0 0.0
    %99 = vmatpush1.msra.mxu0 0.0
    %100 = vmatprep.subr.mxu0 0.0
    %101 = vmatpush1.msra.mxu0 0.0
    %102 = vmatprep.subr.mxu0 0.0
    %103 = vmatpush1.msra.mxu0 0.0
    %104 = vmatprep.subr.mxu0 0.0
    %105 = vmatpush1.msra.mxu0 0.0
    %106 = vmatprep.subr.mxu0 0.0
    %107 = vmatpush1.msra.mxu0 0.0
    %108 = vmatprep.subr.mxu0 0.0
    %109 = vmatpush1.msra.mxu0 0.0
    %110 = vmatprep.subr.mxu0 0.0
    %111 = vmatpush1.msra.mxu0 0.0
    %112 = vmatprep.subr.mxu0 0.0
    %113 = vmatpush1.msra.mxu0 0.0
    %114 = vmatprep.subr.mxu0 0.0
    %115 = vmatpush1.msra.mxu0 0.0
    %116 = vmatprep.subr.mxu0 0.0
    %117 = vmatpush1.msra.mxu0 0.0
    %118 = vmatprep.subr.mxu0 0.0
    %119 = vmatpush1.msra.mxu0 0.0
    %120 = vmatprep.subr.mxu0 0.0
    %121 = vmatpush1.msra.mxu0 0.0
    %122 = vmatprep.subr.mxu0 0.0
    %123 = vmatpush1.msra.mxu0 0.0
    %124 = vmatprep.subr.mxu0 0.0
    %125 = vmatpush1.msra.mxu0 0.0
    %126 = vmatprep.subr.mxu0 0.0
    %127 = vmatpush1.msra.mxu0 0.0
    %128 = vmatprep.subr.mxu0 0.0
    %129 = vmatpush1.msra.mxu0 0.0
    %130 = vmatprep.subr.mxu0 0.0
    %131 = vmatpush1.msra.mxu0 0.0
    %132 = vmatprep.subr.mxu0 0.0
    %133 = vmatpush1.msra.mxu0 0.0
    %134 = vmatprep.subr.mxu0 0.0
    %135 = vmatpush1.msra.mxu0 0.0
    %136 = vmatprep.subr.mxu0 0.0
    %137 = vmatpush1.msra.mxu0 0.0
    %138 = vmatprep.mubr.f32.mxu0 0.0
    %139 = vmatmul.mubr.f32.gmra.mrb[0].mxu0 %v72
    %v140 = vpop.f32.mrb[0].mxu0
    %v141 = vadd.f32 %v68, %v140
    %v142 = vpop.f32.mrb[0].mxu0
    %143 = vdwg.mxu0
    %v144 = vmax.f32 %v141, 0.0
    %v145 = vld [vmem:[#allocation7] sm:$0xff]
    %v146 = vld [vmem:[#allocation7 + $0x8] sm:$0xff]
    %v147 = vld [vmem:[#allocation7 + $0x10] sm:$0xff]
    %v148 = vld [vmem:[#allocation7 + $0x18] sm:$0xff]
    %v149 = vld [vmem:[%s4] sm:$0x1]
    %v151 = vlaneseq
    %v152 = vshrl.u32 %v151, 7
    %v153 = vsub.s32 0, %v152
    %v154 = vrot.slane %v149, %v153
    %vm156 = vcmask 261120
    %v158 = vsel %vm156, %v144, 0
    %160 = vmatprep.subr.mxu0 0.0
    %161 = vmatpush1.msra.mxu0 %v145
    %162 = vmatprep.subr.mxu0 0.0
    %163 = vmatpush1.msra.mxu0 %v146
    %164 = vmatprep.subr.mxu0 0.0
    %165 = vmatpush1.msra.mxu0 %v147
    %166 = vmatprep.subr.mxu0 0.0
    %167 = vmatpush1.msra.mxu0 %v148
    %168 = vmatprep.subr.mxu0 0.0
    %169 = vmatpush1.msra.mxu0 0.0
    %170 = vmatprep.subr.mxu0 0.0
    %171 = vmatpush1.msra.mxu0 0.0
    %172 = vmatprep.subr.mxu0 0.0
    %173 = vmatpush1.msra.mxu0 0.0
    %174 = vmatprep.subr.mxu0 0.0
    %175 = vmatpush1.msra.mxu0 0.0
    %176 = vmatprep.subr.mxu0 0.0
    %177 = vmatpush1.msra.mxu0 0.0
    %178 = vmatprep.subr.mxu0 0.0
    %179 = vmatpush1.msra.mxu0 0.0
    %180 = vmatprep.subr.mxu0 0.0
    %181 = vmatpush1.msra.mxu0 0.0
    %182 = vmatprep.subr.mxu0 0.0
    %183 = vmatpush1.msra.mxu0 0.0
    %184 = vmatprep.subr.mxu0 0.0
    %185 = vmatpush1.msra.mxu0 0.0
    %186 = vmatprep.subr.mxu0 0.0
    %187 = vmatpush1.msra.mxu0 0.0
    %188 = vmatprep.subr.mxu0 0.0
    %189 = vmatpush1.msra.mxu0 0.0
    %190 = vmatprep.subr.mxu0 0.0
    %191 = vmatpush1.msra.mxu0 0.0
    %192 = vmatprep.subr.mxu0 0.0
    %193 = vmatpush1.msra.mxu0 0.0
    %194 = vmatprep.subr.mxu0 0.0
    %195 = vmatpush1.msra.mxu0 0.0
    %196 = vmatprep.subr.mxu0 0.0
    %197 = vmatpush1.msra.mxu0 0.0
    %198 = vmatprep.subr.mxu0 0.0
    %199 = vmatpush1.msra.mxu0 0.0
    %200 = vmatprep.subr.mxu0 0.0
    %201 = vmatpush1.msra.mxu0 0.0
    %202 = vmatprep.subr.mxu0 0.0
    %203 = vmatpush1.msra.mxu0 0.0
    %204 = vmatprep.subr.mxu0 0.0
    %205 = vmatpush1.msra.mxu0 0.0
    %206 = vmatprep.subr.mxu0 0.0
    %207 = vmatpush1.msra.mxu0 0.0
    %208 = vmatprep.subr.mxu0 0.0
    %209 = vmatpush1.msra.mxu0 0.0
    %210 = vmatprep.subr.mxu0 0.0
    %211 = vmatpush1.msra.mxu0 0.0
    %212 = vmatprep.subr.mxu0 0.0
    %213 = vmatpush1.msra.mxu0 0.0
    %214 = vmatprep.subr.mxu0 0.0
    %215 = vmatpush1.msra.mxu0 0.0
    %216 = vmatprep.subr.mxu0 0.0
    %217 = vmatpush1.msra.mxu0 0.0
    %218 = vmatprep.subr.mxu0 0.0
    %219 = vmatpush1.msra.mxu0 0.0
    %220 = vmatprep.subr.mxu0 0.0
    %221 = vmatpush1.msra.mxu0 0.0
    %222 = vmatprep.subr.mxu0 0.0
    %223 = vmatpush1.msra.mxu0 0.0
    %224 = vmatprep.mubr.f32.mxu0 0.0
    %225 = vmatmul.mubr.f32.gmra.mrb[0].mxu0 %v158
    %v226 = vpop.f32.mrb[0].mxu0
    %v227 = vadd.f32 %v154, %v226
    %v228 = vpop.f32.mrb[0].mxu0
    %229 = vdwg.mxu0
    %230 = vmax.xlane.f32.xlu0 %v227
    %v231 = vpop.xlane.xlu0 %230
    %v232 = vsub.f32 %v227, %v231
    %v233 = vmul.f32 %v232, 1.442695
    %v234 = vpow.pop %v233
    %235 = vadd.xlane.f32.xlu0 %v234
    %v236 = vpop.xlane.xlu0 %235
    %v237 = vrcp.pop %v236
    %v238 = vmul.f32 %v236, %v237
    %v239 = vsub.f32 2.0, %v238
    %v240 = vmul.f32 %v237, %v239
    %v241 = vmul.f32 %v234, %v240
    %242 = vst [vmem:[#allocation8] sm:$0xff] %v241
    // Predicated region
    $region34: #{tpu_custom_call.1} parent=1 // pred_check
      _
    $region35: #{tpu_custom_call.1} parent=1 // pred_check_branch
      %244 = sbr.rel (0) target = $region37
    $region36: #{tpu_custom_call.1} parent=1 // pred_region
      %s246 = ssub.s32 128, 128
      %247 = vsyncadd [#allocation4], %s246
      %s249 = sshll.u32 [#allocation8], 4
      %s250 = int_to_ptr.vmem [resolvable:$true] %s249
      %252 = dma.vmem_to_hbm [thread:$0]  %s250, 128, %s5, [#allocation4]
    $region37: #{tpu_custom_call.1} parent=1 // pred_fallthru
      _
    // Predicated region
    $region38: #{tpu_custom_call.1} parent=1 // pred_check
      _
    $region39: #{tpu_custom_call.1} parent=1 // pred_check_branch
      %254 = sbr.rel (0) target = $region41
    $region40: #{tpu_custom_call.1} parent=1 // pred_region
      %255 = dma.done [#allocation4], 128
    $region41: #{tpu_custom_call.1} parent=1 // pred_fallthru
      _
    %256 = vsyncpa [#allocation3], 1
    %257 = vsyncpa [#allocation6], 1
    %258 = vsyncpa [#allocation4], 1

</llo_original>
